<compile_context>
chip_gen: v6e
topology: v6e:2x2x1
jax: 0.10.0
libtpu: 0.0.40
codegen_flags: <defaults>
</compile_context>

<pallas_src>
import jax
import jax.numpy as jnp
from jax import lax
from jax.experimental import pallas as pl
from jax.experimental.pallas import tpu as pltpu


def _round_up(a, b):
    return ((a + b - 1) // b) * b


def _make_kernel(n_valid, tn, tpc):
    """Kernel: acc(1,D) += s_tile(1,tn) @ x_tile(tn,D), masked for the tail tile."""

    def kernel(s_ref, x_ref, out_ref, acc_ref):
        c = pl.program_id(0)          # core / node-range split (parallel)
        k = pl.program_id(1)          # tile index within the core's range (reduction)

        @pl.when(k == 0)
        def _init():
            acc_ref[...] = jnp.zeros_like(acc_ref)

        # Global tile index and number of valid rows in this tile.  Rows beyond
        # `valid` are stale VMEM (could be NaN) -> zero them explicitly; do NOT
        # rely on the zero-padded s entries alone (0 * NaN = NaN).
        t = c * tpc + k
        valid = n_valid - t * tn
        rows = lax.broadcasted_iota(jnp.int32, x_ref.shape, 0)
        x_tile = jnp.where(rows < valid, x_ref[...], 0.0)

        # Partial GEMV on the MXU, f32 accumulation.
        acc_ref[...] += jnp.dot(s_ref[...], x_tile,
                                preferred_element_type=jnp.float32)

        @pl.when(k == pl.num_programs(1) - 1)
        def _finalize():
            out_ref[...] = acc_ref[...].reshape(out_ref.shape)

    return kernel


def build_mean_adj_vector(ei, num_nodes):
    """colmean(A_hat) for gcn_norm(add_self_loops=True, flow='target_to_source'),
    built sparsely from edge_index in O(E + N) -- no dense N x N adjacency."""
    row, col = ei[0], ei[1]
    ones = jnp.ones(row.shape, jnp.float32)

    deg_edges = jnp.zeros((num_nodes,), jnp.float32).at[row].add(ones)
    self_cnt = jnp.zeros((num_nodes,), jnp.float32).at[row].add(
        jnp.where(row == col, 1.0, 0.0))
    has_self = self_cnt > 0
    deg = deg_edges + jnp.where(has_self, 0.0, 1.0)   # add_remaining_self_loops
    dinv = jnp.where(deg > 0, 1.0 / jnp.sqrt(deg), 0.0)

    col_w = jnp.zeros((num_nodes,), jnp.float32).at[col].add(dinv[row])
    col_w = col_w + jnp.where(has_self, 0.0, dinv)
    return dinv * col_w / jnp.float32(num_nodes)      # 1/N (mean) folded in


def gcn_forward(x, ei, w_gcn, b_gcn, w_out, b_out, *, tn=None):
    """x: [N, D] float32, ei: [2, E] int32.  Returns [out_dim] float32."""
    n, d = x.shape
    o = w_out.shape[0]

    s = build_mean_adj_vector(ei, n)                  # (n,) f32

    # ---- Tile sizing (scaled with D, capped by VMEM incl. lane padding) ----
    lane_d = _round_up(d, 128)                        # lane-padded tile width in VMEM
    if tn is None:
        tn_hbm = ((4 << 20) // (d * 4)) // 128 * 128          # ~4 MiB HBM per x tile
        tn_vmem = ((14 << 20) // (lane_d * 4)) // 128 * 128   # <=14 MiB VMEM per buffer
        tn = max(128, min(tn_hbm, tn_vmem))
    else:
        tn = max(128, _round_up(tn, 128))

    if n < 128:
        # Tiny graph: row-pad to a single 128-row tile (copy cost is negligible here).
        x_k = jnp.pad(x, ((0, 128 - n), (0, 0)))
        n_rows = 128
    else:
        # Large graph: never copy x; the partial last tile is masked in-kernel.
        x_k = x
        n_rows = n
    tn = min(tn, (n_rows // 128) * 128)

    num_tiles = pl.cdiv(n_rows, tn)
    cores = 2 if num_tiles >= 2 else 1                # v7x: one node-range per TC
    tpc = pl.cdiv(num_tiles, cores)                   # tiles per core
    last_tile = num_tiles - 1

    # s is tiny: zero-pad it to cover every (possibly phantom) tile.
    n_pad = cores * tpc * tn
    s_p = jnp.pad(s, (0, n_pad - n)).reshape(1, n_pad)

    if cores * tpc == num_tiles:
        x_map = lambda c, k: (c * tpc + k, 0)
    else:
        # Odd tile count: clamp phantom tiles into range (their output is masked to 0).
        x_map = lambda c, k: (jnp.minimum(c * tpc + k, last_tile), 0)

    # ---- VMEM budget: 2 buffers each for the x tile (lane padded) and s tile ----
    x_buf = tn * lane_d * 4
    s_buf = 8 * tn * 4
    vmem_limit = int(min(max(2 * (x_buf + s_buf) + (2 << 20), 16 << 20), 48 << 20))

    partials = pl.pallas_call(
        _make_kernel(n, tn, tpc),
        out_shape=jax.ShapeDtypeStruct((cores, 1, d), jnp.float32),
        grid_spec=pltpu.PrefetchScalarGridSpec(
            num_scalar_prefetch=0,
            grid=(cores, tpc),
            in_specs=[
                pl.BlockSpec((1, tn), lambda c, k: (0, c * tpc + k)),   # s tile (streamed)
                pl.BlockSpec((tn, d), x_map),                           # x tile (streamed)
            ],
            out_specs=pl.BlockSpec((1, 1, d), lambda c, k: (c, 0, 0)),
            scratch_shapes=[pltpu.VMEM((1, d), jnp.float32)],
        ),
        compiler_params=pltpu.CompilerParams(
            dimension_semantics=("parallel", "arbitrary"),
            vmem_limit_bytes=vmem_limit,
        ),
    )(s_p, x_k)

    # Mean-aggregated node features (sum of per-core partials).
    m = jnp.sum(partials[:, 0, :], axis=0)                              # (d,)

    # Epilogue in plain XLA: GCNConv.lin + bias (exact: mean is linear), Linear, log_softmax.
    h = m @ w_gcn.T + b_gcn
    y = h @ w_out.T + b_out
    out = jax.nn.log_softmax(y, axis=0)
    # torch: `x if outdim == 1 else x.squeeze(0)`; squeeze(0) on a 1-D tensor is a no-op.
    return out


def reference_forward(x, ei, w_gcn, b_gcn, w_out, b_out):
    """Dense reference matching the original module semantics."""
    n = x.shape[0]
    row, col = ei[0], ei[1]
    a = jnp.zeros((n, n), jnp.float32).at[row, col].add(1.0)
    has_self = jnp.diag(a) > 0
    a = a + jnp.diag(jnp.where(has_self, 0.0, 1.0))
    deg = jnp.sum(a, axis=1)
    dinv = jnp.where(deg > 0, 1.0 / jnp.sqrt(deg), 0.0)
    adj = dinv[:, None] * a * dinv[None, :]
    h = adj @ (x @ w_gcn.T) + b_gcn[None, :]
    m = jnp.mean(h, axis=0)
    y = m @ w_out.T + b_out
    return jax.nn.log_softmax(y, axis=0)


if __name__ == "__main__":
    key = jax.random.PRNGKey(0)
    N, IN_DIM, OUT_DIM, E = 300, 32, 4, 900

    k_x, k_wg, k_wo, k_bo, k_src, k_dst = jax.random.split(key, 6)
    x = jax.random.normal(k_x, (N, IN_DIM), jnp.float32)
    ei = jnp.stack(
        [jax.random.randint(k_src, (E,), 0, N, jnp.int32),
         jax.random.randint(k_dst, (E,), 0, N, jnp.int32)], axis=0)

    # Deterministic parameters (shapes match GCNConv(in,in) + Linear(in,out)).
    w_gcn = jax.random.normal(k_wg, (IN_DIM, IN_DIM), jnp.float32) * 0.1
    b_gcn = jnp.zeros((IN_DIM,), jnp.float32)        # GCNConv bias init = zeros
    w_out = jax.random.normal(k_wo, (OUT_DIM, IN_DIM), jnp.float32) * 0.1
    b_out = jax.random.normal(k_bo, (OUT_DIM,), jnp.float32) * 0.1

    ref = reference_forward(x, ei, w_gcn, b_gcn, w_out, b_out)

    # 1) Auto tiling (2 tiles, 2-way core split, masked tail tile).
    out = jax.block_until_ready(gcn_forward(x, ei, w_gcn, b_gcn, w_out, b_out))
    assert out.shape == (OUT_DIM,)
    assert jnp.allclose(out, ref, atol=1e-4, rtol=1e-4)

    # 2) Forced small tiles -> odd tile count -> exercises the clamped/masked phantom tile.
    out_small = jax.block_until_ready(
        gcn_forward(x, ei, w_gcn, b_gcn, w_out, b_out, tn=128))
    assert jnp.allclose(out_small, ref, atol=1e-4, rtol=1e-4)

    # 3) Tiny-graph path (row padding, single tile, single core).
    N2, E2 = 8, 12
    x2 = x[:N2]
    ei2 = jnp.stack(
        [jax.random.randint(k_src, (E2,), 0, N2, jnp.int32),
         jax.random.randint(k_dst, (E2,), 0, N2, jnp.int32)], axis=0)
    out2 = jax.block_until_ready(gcn_forward(x2, ei2, w_gcn, b_gcn, w_out, b_out))
    ref2 = reference_forward(x2, ei2, w_gcn, b_gcn, w_out, b_out)
    assert jnp.allclose(out2, ref2, atol=1e-4, rtol=1e-4)

    print("KERNEL_OK")
</pallas_src>

<mosaic_0001>
module attributes {stable_mosaic.version = 11 : i64} {
  func.func @kernel(%arg0: i32, %arg1: i32, %arg2: memref<1x256xf32, #tpu.memory_space<vmem>>, %arg3: memref<256x32xf32, #tpu.memory_space<vmem>>, %arg4: memref<1x1x32xf32, #tpu.memory_space<vmem>>, %arg5: memref<1x32xf32, #tpu.memory_space<vmem>>) attributes {dimension_semantics = [#tpu.dimension_semantics<parallel>, #tpu.dimension_semantics<arbitrary>], iteration_bounds = array<i64: 2, 1>, scalar_prefetch = 0 : i64, scratch_operands = 1 : i64, tpu.core_type = #tpu.core_type<tc>, window_params = [{transform_indices = @transform_0, window_bounds = array<i64: 1, 256>}, {transform_indices = @transform_1, window_bounds = array<i64: 256, 32>}, {transform_indices = @transform_2, window_bounds = array<i64: 1, 1, 32>}]} {
    %c0_i32 = arith.constant 0 : i32
    %0 = arith.cmpi eq, %arg1, %c0_i32 : i32
    %1 = arith.extui %0 : i1 to i32
    %c0_i32_0 = arith.constant 0 : i32
    %2 = arith.cmpi ne, %1, %c0_i32_0 : i32
    scf.if %2 {
      %cst_11 = arith.constant 0.000000e+00 : f32
      %21 = vector.broadcast %cst_11 : f32 to vector<1x32xf32>
      %c0_12 = arith.constant 0 : index
      %c0_13 = arith.constant 0 : index
      %22 = vector.load %arg5[%c0_12, %c0_13] : memref<1x32xf32, #tpu.memory_space<vmem>>, vector<1x32xf32>
      tpu.vector_store %arg5[%c0_12, %c0_13], %21 {strides = array<i32>} : memref<1x32xf32, #tpu.memory_space<vmem>>, vector<1x32xf32>,
    } else {
    }
    %c1_i32 = arith.constant 1 : i32
    %3 = arith.muli %arg0, %c1_i32 : i32
    %4 = arith.addi %3, %arg1 : i32
    %c256_i32 = arith.constant 256 : i32
    %5 = arith.muli %4, %c256_i32 : i32
    %c300_i32 = arith.constant 300 : i32
    %6 = arith.subi %c300_i32, %5 : i32
    %7 = tpu.iota {dimensions = array<i32: 0>} : vector<256x32xi32>
    %8 = vector.broadcast %6 : i32 to vector<256x32xi32>
    %9 = arith.cmpi slt, %7, %8 : vector<256x32xi32>
    %c0 = arith.constant 0 : index
    %c0_1 = arith.constant 0 : index
    %10 = vector.load %arg3[%c0, %c0_1] : memref<256x32xf32, #tpu.memory_space<vmem>>, vector<256x32xf32>
    %cst = arith.constant 0.000000e+00 : f32
    %11 = vector.broadcast %cst : f32 to vector<256x32xf32>
    %12 = arith.select %9, %10, %11 : vector<256x32xi1>, vector<256x32xf32>
    %c0_2 = arith.constant 0 : index
    %c0_3 = arith.constant 0 : index
    %13 = vector.load %arg5[%c0_2, %c0_3] : memref<1x32xf32, #tpu.memory_space<vmem>>, vector<1x32xf32>
    %c0_4 = arith.constant 0 : index
    %c0_5 = arith.constant 0 : index
    %14 = vector.load %arg2[%c0_4, %c0_5] : memref<1x256xf32, #tpu.memory_space<vmem>>, vector<1x256xf32>
    %cst_6 = arith.constant dense<0.000000e+00> : vector<1x32xf32>
    %15 = tpu.matmul %14, %12, %cst_6 {dimension_numbers = #tpu.dot_dimension_numbers<[1], [0], [0], [1], [0, 0, 1, 1], [], []>} : vector<1x256xf32>, vector<256x32xf32>, vector<1x32xf32> -> vector<1x32xf32>
    %16 = arith.addf %13, %15 : vector<1x32xf32>
    %c0_7 = arith.constant 0 : index
    %c0_8 = arith.constant 0 : index
    %17 = vector.load %arg5[%c0_7, %c0_8] : memref<1x32xf32, #tpu.memory_space<vmem>>, vector<1x32xf32>
    tpu.vector_store %arg5[%c0_7, %c0_8], %16 {strides = array<i32>} : memref<1x32xf32, #tpu.memory_space<vmem>>, vector<1x32xf32>,
    %c0_i32_9 = arith.constant 0 : i32
    %18 = arith.cmpi eq, %arg1, %c0_i32_9 : i32
    %19 = arith.extui %18 : i1 to i32
    %c0_i32_10 = arith.constant 0 : i32
    %20 = arith.cmpi ne, %19, %c0_i32_10 : i32
    scf.if %20 {
      %c0_11 = arith.constant 0 : index
      %c0_12 = arith.constant 0 : index
      %21 = vector.load %arg5[%c0_11, %c0_12] : memref<1x32xf32, #tpu.memory_space<vmem>>, vector<1x32xf32>
      %22 = vector.shape_cast %21 : vector<1x32xf32> to vector<1x1x32xf32>
      %c0_13 = arith.constant 0 : index
      %c0_14 = arith.constant 0 : index
      %c0_15 = arith.constant 0 : index
      %23 = vector.load %arg4[%c0_13, %c0_14, %c0_15] : memref<1x1x32xf32, #tpu.memory_space<vmem>>, vector<1x1x32xf32>
      tpu.vector_store %arg4[%c0_13, %c0_14, %c0_15], %22 {strides = array<i32>} : memref<1x1x32xf32, #tpu.memory_space<vmem>>, vector<1x1x32xf32>,
    } else {
    }
    return
  }
  func.func @transform_0(%arg0: i32, %arg1: i32) -> (i32, i32) {
    %c1_i32 = arith.constant 1 : i32
    %0 = arith.muli %arg0, %c1_i32 : i32
    %1 = arith.addi %0, %arg1 : i32
    %c0_i32 = arith.constant 0 : i32
    %c0_i32_0 = arith.constant 0 : i32
    return %c0_i32, %1 : i32, i32
  }
  func.func @transform_1(%arg0: i32, %arg1: i32) -> (i32, i32) {
    %c1_i32 = arith.constant 1 : i32
    %0 = arith.muli %arg0, %c1_i32 : i32
    %1 = arith.addi %0, %arg1 : i32
    %c0_i32 = arith.constant 0 : i32
    %c0_i32_0 = arith.constant 0 : i32
    return %1, %c0_i32 : i32, i32
  }
  func.func @transform_2(%arg0: i32, %arg1: i32) -> (i32, i32, i32) {
    %c0_i32 = arith.constant 0 : i32
    %c0_i32_0 = arith.constant 0 : i32
    %c0_i32_1 = arith.constant 0 : i32
    return %arg0, %c0_i32, %c0_i32_0 : i32, i32, i32
  }
}

</mosaic_0001>

<llo_original>
// kernel: tpu_custom_call.1
$region0: #{tpu_custom_call.1}
  #allocation0 [shape = 'u32[]', space=smem, size = 0x4, offset = 0x4, fixed_abs, tag = 'smem constant byte address 0x4 - core index']
  #allocation1 [shape = 'u32[144,128]{1,0:T(1,128)}', space=vmem, size = 0x12000, scoped, tag = 'internal scratch']
  #allocation2 [shape = 'f32[1,32]{1,0:T(1,128)}', space=vmem, size = 0x200, scoped, tag = 'scratch operand']
  %s0 = inlined_call_operand.vmem [shape: f32[1,512], index: 0, kind: input, shape index: {}]
  %s1 = inlined_call_operand.vmem [shape: f32[300,32], index: 1, kind: input, shape index: {}]
  %s2 = inlined_call_operand.hbm [shape: f32[2,1,32], index: 2, kind: output, shape index: {}]
  %s3 = sld [smem:[#allocation0]]
  $region49: #{tpu_custom_call.1} parent=0
    _
  %s5 = ssub.s32 1, %s3
  %s6 = scalar_select 0, %s5, %s3
  $region1: #{tpu_custom_call.1} parent=0
    #allocation3 [shape = 'u8[1024]{0}', space=vmem, size = 0x400, scoped, tag = 'output window, operand 0']
    #allocation4 [shape = 's32[2]{0}', space=sflag, size = 0x8, scoped, tag = 'scoped memory for tpu_custom_call.1']
    %7 = vsyncpa [#allocation4], 0
    %s8 = scalar_lea.sflag [#allocation4], 1
    %9 = vsyncpa %s8, 0
    loop: start=0, step=1, limit=4
    $region2: #{tpu_custom_call.1} parent=1 // loop_pre_header
      _
    $region3: #{tpu_custom_call.1} parent=1 // loop_header
      %s11 = sphi 0, %s15
      %p12 = scmp.ge.s32.totalorder %s11, 4
      %s18 = sphi 0, %s30
      %s19 = sphi 0, %s26
      %s20 = sphi 0, %s18
      %s21 = sphi 0, %s19
      %s22 = sphi 0, %s20
      %s23 = sphi 0, %s21
      %s35 = sphi 0, %s37
      %s38 = sphi 0, %s35
      %s39 = sphi 0, %s38
      %s55 = sphi 0, %s39
      %s63 = sphi 0, %s65
      %s66 = sphi 0, %s63
      %s67 = sphi 0, %s66
      %s83 = sphi 0, %s67
      %s89 = sphi 0, %s91
      %s92 = sphi 0, %s89
      %s93 = sphi 0, %s92
      %s109 = sphi 0, %s93
    $region4: #{tpu_custom_call.1} parent=1 // loop_header_branch
      %14 = sbr.rel (%p12) target = $region8
    $region5: #{tpu_custom_call.1} parent=1 // loop_body
      %s16 = ssub.s32 %s11, 1
      %s17 = ssub.s32 %s11, 2
      %s24 = sadd.s32 1, %s19
      %p25 = scmp.ge.s32.totalorder %s24, 1
      %s26 = scalar_select %p25, 0, %s24
      %s27 = sadd.s32 1, %s18
      %s28 = scalar_select %p25, %s27, %s18
      %p29 = scmp.ge.s32.totalorder %s28, 2
      %s30 = scalar_select %p29, 0, %s28
      %s31 = sadd.s32 %s18, %s19
      %s32 = sadd.s32 %s30, %s26
      %s33 = ssub.s32 %s31, %s32
      %p34 = scmp.eq.s32.totalorder %s33, 0
      %s36 = sadd.s32 %s35, 1
      %s37 = scalar_select %p34, %s35, %s36
      %p40 = pneg %p34
      %p41 = scmp.eq.s32.totalorder %s11, 1
      %p42 = por %p40, %p41
      %p43 = scmp.ne.s32.totalorder %s35, %s38
      %p44 = scmp.eq.s32.totalorder %s11, 0
      %p45 = por %p43, %p44
      %p46 = scmp.ne.s32.totalorder %s35, %s38
      %p47 = scmp.eq.s32.totalorder %s16, 1
      %p48 = por %p46, %p47
      %p49 = scmp.ne.s32.totalorder %s38, %s39
      %p50 = scmp.eq.s32.totalorder %s16, 0
      %p51 = por %p49, %p50
      %p52 = scmp.ne.s32.totalorder %s38, %s39
      %p53 = scmp.eq.s32.totalorder %s17, 1
      %p54 = por %p52, %p53
      %p56 = scmp.ne.s32.totalorder %s39, %s55
      %p57 = scmp.eq.s32.totalorder %s17, 0
      %p58 = por %p56, %p57
      %s59 = sadd.s32 %s18, %s19
      %s60 = sadd.s32 %s30, %s26
      %s61 = ssub.s32 %s59, %s60
      %p62 = scmp.eq.s32.totalorder %s61, 0
      %s64 = sadd.s32 %s63, 1
      %s65 = scalar_select %p62, %s63, %s64
      %p68 = pneg %p62
      %p69 = scmp.eq.s32.totalorder %s11, 1
      %p70 = por %p68, %p69
      %p71 = scmp.ne.s32.totalorder %s63, %s66
      %p72 = scmp.eq.s32.totalorder %s11, 0
      %p73 = por %p71, %p72
      %p74 = scmp.ne.s32.totalorder %s63, %s66
      %p75 = scmp.eq.s32.totalorder %s16, 1
      %p76 = por %p74, %p75
      %p77 = scmp.ne.s32.totalorder %s66, %s67
      %p78 = scmp.eq.s32.totalorder %s16, 0
      %p79 = por %p77, %p78
      %p80 = scmp.ne.s32.totalorder %s66, %s67
      %p81 = scmp.eq.s32.totalorder %s17, 1
      %p82 = por %p80, %p81
      %p84 = scmp.ne.s32.totalorder %s67, %s83
      %p85 = scmp.eq.s32.totalorder %s17, 0
      %p86 = por %p84, %p85
      %s87 = ssub.s32 %s18, %s30
      %p88 = scmp.eq.s32.totalorder %s87, 0
      %s90 = sadd.s32 %s89, 1
      %s91 = scalar_select %p88, %s89, %s90
      %p94 = pneg %p88
      %p95 = scmp.eq.s32.totalorder %s11, 1
      %p96 = por %p94, %p95
      %p97 = scmp.ne.s32.totalorder %s89, %s92
      %p98 = scmp.eq.s32.totalorder %s11, 0
      %p99 = por %p97, %p98
      %p100 = scmp.ne.s32.totalorder %s89, %s92
      %p101 = scmp.eq.s32.totalorder %s16, 1
      %p102 = por %p100, %p101
      %p103 = scmp.ne.s32.totalorder %s92, %s93
      %p104 = scmp.eq.s32.totalorder %s16, 0
      %p105 = por %p103, %p104
      %p106 = scmp.ne.s32.totalorder %s92, %s93
      %p107 = scmp.eq.s32.totalorder %s17, 1
      %p108 = por %p106, %p107
      %p110 = scmp.ne.s32.totalorder %s93, %s109
      %p111 = scmp.eq.s32.totalorder %s17, 0
      %p112 = por %p110, %p111
      %p113 = scmp.le.s32.totalorder 1, %s11
      %p114 = scmp.lt.s32.totalorder %s11, 3
      %p115 = pnand %p113, %p114
      %p116 = pneg %p115
      // Predicated region
      $region9: #{tpu_custom_call.1} parent=5 // pred_check
        _
      $region10: #{tpu_custom_call.1} parent=5 // pred_check_branch
        %118 = sbr.rel (%p115) target = $region12
      $region11: #{tpu_custom_call.1} parent=5 // pred_region
        %s119 = ssub.s32 %s11, 1
      $region12: #{tpu_custom_call.1} parent=5 // pred_fallthru
        _
      %p120 = scmp.lt.s32.totalorder %s11, 2
      // Predicated region
      $region13: #{tpu_custom_call.1} parent=5 // pred_check
        %p121 = pneg %p120
      $region14: #{tpu_custom_call.1} parent=5 // pred_check_branch
        %123 = sbr.rel (%p121) target = $region16
      $region15: #{tpu_custom_call.1} parent=5 // pred_region
        // Predicated region
        $region17: #{tpu_custom_call.1} parent=15 // pred_check
          %p124 = pneg %p45
        $region18: #{tpu_custom_call.1} parent=15 // pred_check_branch
          %126 = sbr.rel (%p124) target = $region20
        $region19: #{tpu_custom_call.1} parent=15 // pred_region
          %s127 = sadd.s32 %s18, %s19
          %s128 = smul.u32 2, %s127
          %p129 = scmp.lt.s32.totalorder %s128, 3
          %s130 = scalar_select %p129, %s128, 3
          %s131 = scalar_lea.vmem %s0, %s130
          %s132 = sadd.s32 %s18, %s19
          %s133 = smul.u32 2, %s132
        $region20: #{tpu_custom_call.1} parent=15 // pred_fallthru
          _
        // Predicated region
        $region21: #{tpu_custom_call.1} parent=15 // pred_check
          %p134 = pneg %p73
        $region22: #{tpu_custom_call.1} parent=15 // pred_check_branch
          %136 = sbr.rel (%p134) target = $region24
        $region23: #{tpu_custom_call.1} parent=15 // pred_region
          %s137 = sadd.s32 %s18, %s19
          %s138 = smul.u32 32, %s137
          %s139 = ssub.s32 38, %s138
          %p140 = scmp.lt.s32.totalorder %s139, 32
          %s141 = scalar_select %p140, %s139, 32
          %s142 = smul.u32 128, %s141
          %p143 = scmp.lt.s32.totalorder %s138, 37
          %s144 = scalar_select %p143, %s138, 37
          %s145 = smul.addr %s144, 8
          %s146 = scalar_lea.vmem %s1, %s145
          %s147 = sadd.s32 %s18, %s19
          %s148 = smul.u32 32, %s147
          %s149 = ssub.s32 38, %s148
          %p150 = scmp.lt.s32.totalorder %s149, 32
          %s151 = scalar_select %p150, %s149, 32
          %s152 = smul.u32 128, %s151
        $region24: #{tpu_custom_call.1} parent=15 // pred_fallthru
          _
      $region16: #{tpu_custom_call.1} parent=5 // pred_fallthru
        _
      %p153 = scmp.le.s32.totalorder 1, %s11
      %p154 = scmp.lt.s32.totalorder %s11, 3
      %p155 = pnand %p153, %p154
      %p156 = pneg %p155
      // Predicated region
      $region25: #{tpu_custom_call.1} parent=5 // pred_check
        _
      $region26: #{tpu_custom_call.1} parent=5 // pred_check_branch
        %158 = sbr.rel (%p155) target = $region28
      $region27: #{tpu_custom_call.1} parent=5 // pred_region
        %s159 = ssub.s32 %s11, 1
        %s160 = sadd.s32 %s20, %s21
        %s161 = smul.u32 2, %s160
        %p162 = scmp.lt.s32.totalorder %s161, 3
        %s163 = scalar_select %p162, %s161, 3
        %s164 = scalar_lea.vmem %s0, %s163
        %p165 = pneg %p51
        %p166 = pneg %p48
        %s167 = sadd.s32 %s20, %s21
        %s168 = smul.u32 32, %s167
        %s169 = ssub.s32 38, %s168
        %p170 = scmp.lt.s32.totalorder %s169, 32
        %s171 = scalar_select %p170, %s169, 32
        %s172 = smul.u32 128, %s171
        %p173 = scmp.lt.s32.totalorder %s168, 37
        %s174 = scalar_select %p173, %s168, 37
        %s175 = smul.addr %s174, 8
        %s176 = scalar_lea.vmem %s1, %s175
        %p177 = pneg %p79
        %p178 = pneg %p76
        %p179 = pneg %p105
        %p180 = pneg %p102
        %s181 = sand.u32 %s92, 1
        %s182 = scalar_lea.sflag [#allocation4], %s181
        %s183 = sand.u32 %s92, 1
        %s184 = scalar_lea.vmem [#allocation3], %s183
        %s185 = sadd.s32 %s20, %s21
        %s186 = smul.u32 2, %s185
        %p187 = scmp.lt.s32.totalorder %s186, 3
        %s188 = scalar_select %p187, %s186, 3
        %s189 = scalar_lea.vmem %s0, %s188
        %s190 = sadd.s32 %s20, %s21
        %s191 = smul.u32 2, %s190
        %s192 = sadd.s32 %s20, %s21
        %s193 = smul.u32 32, %s192
        %s194 = ssub.s32 38, %s193
        %p195 = scmp.lt.s32.totalorder %s194, 32
        %s196 = scalar_select %p195, %s194, 32
        %s197 = smul.u32 128, %s196
        %p198 = scmp.lt.s32.totalorder %s193, 37
        %s199 = scalar_select %p198, %s193, 37
        %s200 = smul.addr %s199, 8
        %s201 = scalar_lea.vmem %s1, %s200
        %s202 = sadd.s32 %s20, %s21
        %s203 = smul.u32 32, %s202
        %s204 = ssub.s32 38, %s203
        %p205 = scmp.lt.s32.totalorder %s204, 32
        %s206 = scalar_select %p205, %s204, 32
        %s207 = smul.u32 128, %s206
        %p208 = scmp.eq.s32.totalorder %s21, 0
        // Predicated region
        $region29: #{tpu_custom_call.1} parent=27 // pred_check
          %p209 = pneg %p208
        $region30: #{tpu_custom_call.1} parent=27 // pred_check_branch
          %211 = sbr.rel (%p209) target = $region32
        $region31: #{tpu_custom_call.1} parent=27 // pred_region
          %vm212 = vcmask 253952
          %213 = vst.msk [vmem:[#allocation2] sm:$0x1] %vm212, 0.0
        $region32: #{tpu_custom_call.1} parent=27 // pred_fallthru
          _
        %s214 = sadd.s32 %s20, %s21
        %s215 = smul.u32 %s214, 256
        %s216 = ssub.s32 300, %s215
        %v217 = vlaneseq
        %v218 = vshrl.u32 %v217, 7
        %v219 = vadd.s32 %v218, 8
        %v220 = vadd.s32 %v218, 16
        %v221 = vadd.s32 %v218, 24
        %v222 = vadd.s32 %v218, 32
        %v223 = vadd.s32 %v218, 40
        %v224 = vadd.s32 %v218, 48
        %v225 = vadd.s32 %v218, 56
        %v226 = vadd.s32 %v218, 64
        %v227 = vadd.s32 %v218, 72
        %v228 = vadd.s32 %v218, 80
        %v229 = vadd.s32 %v218, 88
        %v230 = vadd.s32 %v218, 96
        %v231 = vadd.s32 %v218, 104
        %v232 = vadd.s32 %v218, 112
        %v233 = vadd.s32 %v218, 120
        %v234 = vadd.s32 %v218, 128
        %v235 = vadd.s32 %v218, 136
        %v236 = vadd.s32 %v218, 144
        %v237 = vadd.s32 %v218, 152
        %v238 = vadd.s32 %v218, 160
        %v239 = vadd.s32 %v218, 168
        %v240 = vadd.s32 %v218, 176
        %v241 = vadd.s32 %v218, 184
        %v242 = vadd.s32 %v218, 192
        %v243 = vadd.s32 %v218, 200
        %v244 = vadd.s32 %v218, 208
        %v245 = vadd.s32 %v218, 216
        %v246 = vadd.s32 %v218, 224
        %v247 = vadd.s32 %v218, 232
        %v248 = vadd.s32 %v218, 240
        %v249 = vadd.s32 %v218, 248
        %v250 = vstv %s216
        %vm251 = vcmp.lt.s32.totalorder %v218, %v250
        %vm252 = vcmp.lt.s32.totalorder %v219, %v250
        %vm253 = vcmp.lt.s32.totalorder %v220, %v250
        %vm254 = vcmp.lt.s32.totalorder %v221, %v250
        %vm255 = vcmp.lt.s32.totalorder %v222, %v250
        %vm256 = vcmp.lt.s32.totalorder %v223, %v250
        %vm257 = vcmp.lt.s32.totalorder %v224, %v250
        %vm258 = vcmp.lt.s32.totalorder %v225, %v250
        %vm259 = vcmp.lt.s32.totalorder %v226, %v250
        %vm260 = vcmp.lt.s32.totalorder %v227, %v250
        %vm261 = vcmp.lt.s32.totalorder %v228, %v250
        %vm262 = vcmp.lt.s32.totalorder %v229, %v250
        %vm263 = vcmp.lt.s32.totalorder %v230, %v250
        %vm264 = vcmp.lt.s32.totalorder %v231, %v250
        %vm265 = vcmp.lt.s32.totalorder %v232, %v250
        %vm266 = vcmp.lt.s32.totalorder %v233, %v250
        %vm267 = vcmp.lt.s32.totalorder %v234, %v250
        %vm268 = vcmp.lt.s32.totalorder %v235, %v250
        %vm269 = vcmp.lt.s32.totalorder %v236, %v250
        %vm270 = vcmp.lt.s32.totalorder %v237, %v250
        %vm271 = vcmp.lt.s32.totalorder %v238, %v250
        %vm272 = vcmp.lt.s32.totalorder %v239, %v250
        %vm273 = vcmp.lt.s32.totalorder %v240, %v250
        %vm274 = vcmp.lt.s32.totalorder %v241, %v250
        %vm275 = vcmp.lt.s32.totalorder %v242, %v250
        %vm276 = vcmp.lt.s32.totalorder %v243, %v250
        %vm277 = vcmp.lt.s32.totalorder %v244, %v250
        %vm278 = vcmp.lt.s32.totalorder %v245, %v250
        %vm279 = vcmp.lt.s32.totalorder %v246, %v250
        %vm280 = vcmp.lt.s32.totalorder %v247, %v250
        %vm281 = vcmp.lt.s32.totalorder %v248, %v250
        %vm282 = vcmp.lt.s32.totalorder %v249, %v250
        %v283 = vld [vmem:[%s201] sm:$0xff]
        %v284 = vld [vmem:[%s201 + $0x8] sm:$0xff]
        %v285 = vld [vmem:[%s201 + $0x10] sm:$0xff]
        %v286 = vld [vmem:[%s201 + $0x18] sm:$0xff]
        %v287 = vld [vmem:[%s201 + $0x20] sm:$0xff]
        %v288 = vld [vmem:[%s201 + $0x28] sm:$0xff]
        %v289 = vld [vmem:[%s201 + $0x30] sm:$0xff]
        %v290 = vld [vmem:[%s201 + $0x38] sm:$0xff]
        %v291 = vld [vmem:[%s201 + $0x40] sm:$0xff]
        %v292 = vld [vmem:[%s201 + $0x48] sm:$0xff]
        %v293 = vld [vmem:[%s201 + $0x50] sm:$0xff]
        %v294 = vld [vmem:[%s201 + $0x58] sm:$0xff]
        %v295 = vld [vmem:[%s201 + $0x60] sm:$0xff]
        %v296 = vld [vmem:[%s201 + $0x68] sm:$0xff]
        %v297 = vld [vmem:[%s201 + $0x70] sm:$0xff]
        %v298 = vld [vmem:[%s201 + $0x78] sm:$0xff]
        %v299 = vld [vmem:[%s201 + $0x80] sm:$0xff]
        %v300 = vld [vmem:[%s201 + $0x88] sm:$0xff]
        %v301 = vld [vmem:[%s201 + $0x90] sm:$0xff]
        %v302 = vld [vmem:[%s201 + $0x98] sm:$0xff]
        %v303 = vld [vmem:[%s201 + $0xa0] sm:$0xff]
        %v304 = vld [vmem:[%s201 + $0xa8] sm:$0xff]
        %v305 = vld [vmem:[%s201 + $0xb0] sm:$0xff]
        %v306 = vld [vmem:[%s201 + $0xb8] sm:$0xff]
        %v307 = vld [vmem:[%s201 + $0xc0] sm:$0xff]
        %v308 = vld [vmem:[%s201 + $0xc8] sm:$0xff]
        %v309 = vld [vmem:[%s201 + $0xd0] sm:$0xff]
        %v310 = vld [vmem:[%s201 + $0xd8] sm:$0xff]
        %v311 = vld [vmem:[%s201 + $0xe0] sm:$0xff]
        %v312 = vld [vmem:[%s201 + $0xe8] sm:$0xff]
        %v313 = vld [vmem:[%s201 + $0xf0] sm:$0xff]
        %v314 = vld [vmem:[%s201 + $0xf8] sm:$0xff]
        %v315 = vsel %vm251, %v283, 0.0
        %v316 = vsel %vm252, %v284, 0.0
        %v317 = vsel %vm253, %v285, 0.0
        %v318 = vsel %vm254, %v286, 0.0
        %v319 = vsel %vm255, %v287, 0.0
        %v320 = vsel %vm256, %v288, 0.0
        %v321 = vsel %vm257, %v289, 0.0
        %v322 = vsel %vm258, %v290, 0.0
        %v323 = vsel %vm259, %v291, 0.0
        %v324 = vsel %vm260, %v292, 0.0
        %v325 = vsel %vm261, %v293, 0.0
        %v326 = vsel %vm262, %v294, 0.0
        %v327 = vsel %vm263, %v295, 0.0
        %v328 = vsel %vm264, %v296, 0.0
        %v329 = vsel %vm265, %v297, 0.0
        %v330 = vsel %vm266, %v298, 0.0
        %v331 = vsel %vm267, %v299, 0.0
        %v332 = vsel %vm268, %v300, 0.0
        %v333 = vsel %vm269, %v301, 0.0
        %v334 = vsel %vm270, %v302, 0.0
        %v335 = vsel %vm271, %v303, 0.0
        %v336 = vsel %vm272, %v304, 0.0
        %v337 = vsel %vm273, %v305, 0.0
        %v338 = vsel %vm274, %v306, 0.0
        %v339 = vsel %vm275, %v307, 0.0
        %v340 = vsel %vm276, %v308, 0.0
        %v341 = vsel %vm277, %v309, 0.0
        %v342 = vsel %vm278, %v310, 0.0
        %v343 = vsel %vm279, %v311, 0.0
        %v344 = vsel %vm280, %v312, 0.0
        %v345 = vsel %vm281, %v313, 0.0
        %v346 = vsel %vm282, %v314, 0.0
        %v347 = vld [vmem:[#allocation2] sm:$0x1]
        %v348 = vld [vmem:[%s189] sm:$0x3]
        %v350 = vlaneseq
        %v351 = vshrl.u32 %v350, 7
        %v352 = vsub.s32 0, %v351
        %v353 = vrot.slane %v348, %v352
        %v354 = vlaneseq
        %v355 = vshrl.u32 %v354, 7
        %v356 = vsub.s32 1, %v355
        %v357 = vrot.slane %v348, %v356
        %360 = vmatprep.subr.mxu0 0.0
        %361 = vmatpush1.msra.mxu0 %v330
        %362 = vmatprep.subr.mxu0 0.0
        %363 = vmatpush1.msra.mxu0 %v329
        %364 = vmatprep.subr.mxu0 0.0
        %365 = vmatpush1.msra.mxu0 %v328
        %366 = vmatprep.subr.mxu0 0.0
        %367 = vmatpush1.msra.mxu0 %v327
        %368 = vmatprep.subr.mxu0 0.0
        %369 = vmatpush1.msra.mxu0 %v326
        %370 = vmatprep.subr.mxu0 0.0
        %371 = vmatpush1.msra.mxu0 %v325
        %372 = vmatprep.subr.mxu0 0.0
        %373 = vmatpush1.msra.mxu0 %v324
        %374 = vmatprep.subr.mxu0 0.0
        %375 = vmatpush1.msra.mxu0 %v323
        %376 = vmatprep.subr.mxu0 0.0
        %377 = vmatpush1.msra.mxu0 %v322
        %378 = vmatprep.subr.mxu0 0.0
        %379 = vmatpush1.msra.mxu0 %v321
        %380 = vmatprep.subr.mxu0 0.0
        %381 = vmatpush1.msra.mxu0 %v320
        %382 = vmatprep.subr.mxu0 0.0
        %383 = vmatpush1.msra.mxu0 %v319
        %384 = vmatprep.subr.mxu0 0.0
        %385 = vmatpush1.msra.mxu0 %v318
        %386 = vmatprep.subr.mxu0 0.0
        %387 = vmatpush1.msra.mxu0 %v317
        %388 = vmatprep.subr.mxu0 0.0
        %389 = vmatpush1.msra.mxu0 %v316
        %390 = vmatprep.subr.mxu0 0.0
        %391 = vmatpush1.msra.mxu0 %v315
        %392 = vmatprep.subr.mxu0 0.0
        %393 = vmatpush2.msra.mxu0 %v346
        %394 = vmatprep.subr.mxu0 0.0
        %395 = vmatpush2.msra.mxu0 %v345
        %396 = vmatprep.subr.mxu0 0.0
        %397 = vmatpush2.msra.mxu0 %v344
        %398 = vmatprep.subr.mxu0 0.0
        %399 = vmatpush2.msra.mxu0 %v343
        %400 = vmatprep.subr.mxu0 0.0
        %401 = vmatpush2.msra.mxu0 %v342
        %402 = vmatprep.subr.mxu0 0.0
        %403 = vmatpush2.msra.mxu0 %v341
        %404 = vmatprep.subr.mxu0 0.0
        %405 = vmatpush2.msra.mxu0 %v340
        %406 = vmatprep.subr.mxu0 0.0
        %407 = vmatpush2.msra.mxu0 %v339
        %408 = vmatprep.subr.mxu0 0.0
        %409 = vmatpush2.msra.mxu0 %v338
        %410 = vmatprep.subr.mxu0 0.0
        %411 = vmatpush2.msra.mxu0 %v337
        %412 = vmatprep.subr.mxu0 0.0
        %413 = vmatpush2.msra.mxu0 %v336
        %414 = vmatprep.subr.mxu0 0.0
        %415 = vmatpush2.msra.mxu0 %v335
        %416 = vmatprep.subr.mxu0 0.0
        %417 = vmatpush2.msra.mxu0 %v334
        %418 = vmatprep.subr.mxu0 0.0
        %419 = vmatpush2.msra.mxu0 %v333
        %420 = vmatprep.subr.mxu0 0.0
        %421 = vmatpush2.msra.mxu0 %v332
        %422 = vmatprep.subr.mxu0 0.0
        %423 = vmatpush2.msra.mxu0 %v331
        %424 = vmatprep.mubr.f32.mxu0 %v357
        %425 = vmatmul.mubr.f32.gmra.mxu0 %v353
        %v426 = vpop.f32.mrf.mxu0
        %v427 = vadd.f32 0.0, %v426
        %v428 = vpop.f32.mrf.mxu0
        %429 = vdwg.mxu0
        %v430 = vadd.f32 %v347, %v427
        %vm431 = vcmask 253952
        %432 = vst.msk [vmem:[#allocation2] sm:$0x1] %vm431, %v430
        // Predicated region
        $region33: #{tpu_custom_call.1} parent=27 // pred_check
          %p433 = pneg %p208
        $region34: #{tpu_custom_call.1} parent=27 // pred_check_branch
          %435 = sbr.rel (%p433) target = $region36
        $region35: #{tpu_custom_call.1} parent=27 // pred_region
          %v436 = vld [vmem:[#allocation2] sm:$0x1]
          %437 = vst.msk [vmem:[%s184] sm:$0x1] %vm431, %v436
        $region36: #{tpu_custom_call.1} parent=27 // pred_fallthru
          _
        %s438 = sand.u32 %s92, 1
        %s439 = scalar_lea.sflag [#allocation4], %s438
        %s440 = sand.u32 %s92, 1
        %s441 = scalar_lea.vmem [#allocation3], %s440
        // Predicated region
        $region37: #{tpu_custom_call.1} parent=27 // pred_check
          %p442 = pneg %p102
        $region38: #{tpu_custom_call.1} parent=27 // pred_check_branch
          %444 = sbr.rel (%p442) target = $region40
        $region39: #{tpu_custom_call.1} parent=27 // pred_region
          %s446 = ssub.s32 16, 16
          %447 = vsyncadd %s439, %s446
          %s448 = smul.addr %s20, 16
          %s449 = scalar_lea.hbm %s2, %s448
          %s451 = sshll.u32 %s441, 4
          %s452 = int_to_ptr.vmem [resolvable:$true] %s451
          %454 = dma.vmem_to_hbm [thread:$0]  %s452, 16, %s449, %s439
        $region40: #{tpu_custom_call.1} parent=27 // pred_fallthru
          _
      $region28: #{tpu_custom_call.1} parent=5 // pred_fallthru
        _
      %p455 = scmp.le.s32.totalorder 2, %s11
      // Predicated region
      $region41: #{tpu_custom_call.1} parent=5 // pred_check
        %p456 = pneg %p455
      $region42: #{tpu_custom_call.1} parent=5 // pred_check_branch
        %458 = sbr.rel (%p456) target = $region44
      $region43: #{tpu_custom_call.1} parent=5 // pred_region
        %s459 = ssub.s32 %s11, 2
        // Predicated region
        $region45: #{tpu_custom_call.1} parent=43 // pred_check
          %p460 = pneg %p108
        $region46: #{tpu_custom_call.1} parent=43 // pred_check_branch
          %462 = sbr.rel (%p460) target = $region48
        $region47: #{tpu_custom_call.1} parent=43 // pred_region
          %s463 = sand.u32 %s93, 1
          %s464 = scalar_lea.sflag [#allocation4], %s463
          %s465 = sand.u32 %s93, 1
          %s466 = scalar_lea.vmem [#allocation3], %s465
          %467 = dma.done %s464, 16
        $region48: #{tpu_custom_call.1} parent=43 // pred_fallthru
          _
      $region44: #{tpu_custom_call.1} parent=5 // pred_fallthru
        _
    $region6: #{tpu_custom_call.1} parent=1 // loop_footer
      %s15 = sadd.s32 1, %s11
    $region7: #{tpu_custom_call.1} parent=1 // loop_footer_branch
      %10 = sbr.rel target = $region3
    $region8: #{tpu_custom_call.1} parent=1 // loop_exit
      _
    %468 = vsyncpa [#allocation4], 1
    %s469 = scalar_lea.sflag [#allocation4], 1
    %470 = vsyncpa %s469, 1

</llo_original>
